<compile_context>
chip_gen: v7x
topology: tpu7x:2x2x1
jax: 0.10.0
libtpu: 0.0.40
codegen_flags: <defaults>
</compile_context>

<pallas_src>
import jax
import jax.numpy as jnp
from jax.experimental import pallas as pl
from jax.experimental.pallas import tpu as pltpu

LEG_NUM = 4
LEG_DOF = 3
LEN_HIST = 5
MODEL_IN_SIZE = 2 * LEG_DOF * LEN_HIST   # 30 per-leg input features
HIDDEN = 32                              # synthetic core-model hidden width
OUT_SIZE = LEG_DOF                       # 3 per-leg outputs

IN_ALL = LEG_NUM * MODEL_IN_SIZE         # 120
HID_ALL = LEG_NUM * HIDDEN               # 128
OUT_ALL = LEG_NUM * OUT_SIZE             # 12


def uninet_kernel(x_ref, w1_ref, b1_ref, w2_ref, b2_ref, w3_ref, b3_ref, o_ref):
    """One batch tile: 3 full-width MXU matmuls on block-diagonal weights."""
    # Cast to the MXU operand dtype (bf16 in the fast path) after the DMA.
    x = x_ref[...].astype(w1_ref.dtype)
    h1 = jnp.dot(x, w1_ref[...], preferred_element_type=jnp.float32) + b1_ref[...]
    h1 = jnp.maximum(h1, 0.0)
    h2 = jnp.dot(h1.astype(w2_ref.dtype), w2_ref[...],
                 preferred_element_type=jnp.float32) + b2_ref[...]
    h2 = jnp.maximum(h2, 0.0)
    out = jnp.dot(h2.astype(w3_ref.dtype), w3_ref[...],
                  preferred_element_type=jnp.float32) + b3_ref[...]
    o_ref[...] = out.astype(o_ref.dtype)


def _block_diag(w, n):
    """Place n copies of w [din,dout] on the diagonal of a [n*din, n*dout] matrix."""
    din, dout = w.shape
    bd = jnp.zeros((n * din, n * dout), w.dtype)
    for i in range(n):
        bd = bd.at[i * din:(i + 1) * din, i * dout:(i + 1) * dout].set(w)
    return bd


def pack_params(params, compute_dtype=jnp.bfloat16):
    """Pack shared core-model weights block-diagonally (preserves leg order)."""
    w1, b1, w2, b2, w3, b3 = params
    w1bd = _block_diag(w1, LEG_NUM).astype(compute_dtype)                 # [120, 128]
    w2bd = _block_diag(w2, LEG_NUM).astype(compute_dtype)                 # [128, 128]
    w3bd = _block_diag(w3, LEG_NUM).astype(compute_dtype)                 # [128,  12]
    b1bd = jnp.tile(b1.reshape(1, -1), (1, LEG_NUM)).astype(jnp.float32)  # [1, 128]
    b2bd = jnp.tile(b2.reshape(1, -1), (1, LEG_NUM)).astype(jnp.float32)  # [1, 128]
    b3bd = jnp.tile(b3.reshape(1, -1), (1, LEG_NUM)).astype(jnp.float32)  # [1,  12]
    return (w1bd, b1bd, w2bd, b2bd, w3bd, b3bd)


def _default_tile_b():
    """8192 rows on v6e/v7x, 4096 on the more VMEM/BW-constrained v5e."""
    try:
        kind = jax.devices()[0].device_kind.lower()
    except Exception:
        return 4096
    return 4096 if "v5" in kind else 8192


def _round_up(n, m):
    return ((n + m - 1) // m) * m


def uninet_forward(x, packed_params, *, tile_b=None):
    """x: [B, 120] (f32 or bf16) -> [B, 12] f32, matching torch.cat(dim=1) order."""
    w1bd, b1bd, w2bd, b2bd, w3bd, b3bd = packed_params
    B = x.shape[0]
    assert x.shape[1] == IN_ALL, x.shape

    if tile_b is None:
        tile_b = _default_tile_b()
    tile_b = max(8, _round_up(tile_b, 8))

    # Tile selection:
    #  - tiny batches: single full-extent block (always a legal block shape).
    #  - otherwise: at least 2 grid steps so the "parallel" batch axis actually
    #    shards across both v7x TensorCores, capped at tile_b for VMEM safety.
    if B <= 512:
        tile = B
    else:
        tile = min(tile_b, _round_up(pl.cdiv(B, 2), 8))
    grid = (pl.cdiv(B, tile),)

    def const2(i):          # weights/biases: constant block index -> stay resident
        return (0, 0)

    in_specs = [
        pl.BlockSpec((tile, IN_ALL), lambda i: (i, 0)),
        pl.BlockSpec(w1bd.shape, const2),
        pl.BlockSpec(b1bd.shape, const2),
        pl.BlockSpec(w2bd.shape, const2),
        pl.BlockSpec(b2bd.shape, const2),
        pl.BlockSpec(w3bd.shape, const2),
        pl.BlockSpec(b3bd.shape, const2),
    ]
    out_specs = pl.BlockSpec((tile, OUT_ALL), lambda i: (i, 0))

    return pl.pallas_call(
        uninet_kernel,
        out_shape=jax.ShapeDtypeStruct((B, OUT_ALL), jnp.float32),
        grid=grid,
        in_specs=in_specs,
        out_specs=out_specs,
        compiler_params=pltpu.CompilerParams(
            dimension_semantics=("parallel",),    # shards batch tiles across v7x TCs
            vmem_limit_bytes=40 * 1024 * 1024,    # headroom below v7x's 64 MiB VMEM
        ),
    )(x, w1bd, b1bd, w2bd, b2bd, w3bd, b3bd)


def make_params(key):
    """Deterministic synthetic core-model parameters (shared across all legs)."""
    # TODO(synk): the PyTorch snippet never defines `core_model`; this 30->32->32->3
    # ReLU MLP is a stand-in with the conventional actuator-net shapes.
    k1, k2, k3 = jax.random.split(key, 3)
    w1 = jax.random.normal(k1, (MODEL_IN_SIZE, HIDDEN), jnp.float32) * 0.1
    b1 = jnp.zeros((1, HIDDEN), jnp.float32) + 0.01
    w2 = jax.random.normal(k2, (HIDDEN, HIDDEN), jnp.float32) * 0.1
    b2 = jnp.zeros((1, HIDDEN), jnp.float32) + 0.01
    w3 = jax.random.normal(k3, (HIDDEN, OUT_SIZE), jnp.float32) * 0.1
    b3 = jnp.zeros((1, OUT_SIZE), jnp.float32)
    return (w1, b1, w2, b2, w3, b3)


def uninet_reference(x, params):
    """Pure-JAX reference mirroring the PyTorch per-leg loop + cat(dim=1) exactly."""
    w1, b1, w2, b2, w3, b3 = params
    outs = []
    for i in range(LEG_NUM):
        sub_in = x[:, MODEL_IN_SIZE * i: MODEL_IN_SIZE * (i + 1)]
        h1 = jnp.maximum(sub_in @ w1 + b1, 0.0)
        h2 = jnp.maximum(h1 @ w2 + b2, 0.0)
        outs.append(h2 @ w3 + b3)
    return jnp.concatenate(outs, axis=1)


if __name__ == "__main__":
    key = jax.random.PRNGKey(0)
    kx, kp, kx2, kx3 = jax.random.split(key, 4)
    params = make_params(kp)
    packed_bf16 = pack_params(params, compute_dtype=jnp.bfloat16)  # fast MXU path
    packed_f32 = pack_params(params, compute_dtype=jnp.float32)    # strict-check path

    # Small demo shape implied by the module: batch=2, 120 = 4 legs x 30 features.
    B = 2
    x = jax.random.normal(kx, (B, IN_ALL), jnp.float32)

    # 1) f32 packing: strict check proves block-diagonal packing / leg ordering.
    out_f32 = jax.block_until_ready(uninet_forward(x, packed_f32))
    ref = uninet_reference(x, params)
    assert out_f32.shape == (B, OUT_ALL), out_f32.shape
    assert jnp.allclose(out_f32, ref, atol=1e-4, rtol=1e-4), "mismatch (f32 packing)"

    # 2) bf16 packing (production path): bf16 MXU operands, f32 accumulate.
    out_bf16 = jax.block_until_ready(uninet_forward(x, packed_bf16))
    assert jnp.allclose(out_bf16, ref, atol=5e-2, rtol=5e-2), "mismatch (bf16 packing)"

    # 3) Multi-step grid (exercises double-buffering + >=2 steps for megacore).
    B2 = 1024
    x2 = jax.random.normal(kx2, (B2, IN_ALL), jnp.float32)
    out2 = jax.block_until_ready(uninet_forward(x2, packed_bf16))
    ref2 = uninet_reference(x2, params)
    assert out2.shape == (B2, OUT_ALL), out2.shape
    assert jnp.allclose(out2, ref2, atol=5e-2, rtol=5e-2), "mismatch (tiled batch)"

    # 4) Uneven batch: trailing grid step is padded; outputs must still be correct.
    B3 = 1000
    x3 = jax.random.normal(kx3, (B3, IN_ALL), jnp.float32)
    out3 = jax.block_until_ready(uninet_forward(x3, packed_bf16))
    ref3 = uninet_reference(x3, params)
    assert out3.shape == (B3, OUT_ALL), out3.shape
    assert jnp.allclose(out3, ref3, atol=5e-2, rtol=5e-2), "mismatch (uneven batch)"

    print("KERNEL_OK")
</pallas_src>

<mosaic_0001>
module attributes {stable_mosaic.version = 11 : i64} {
  func.func @uninet_kernel(%arg0: i32, %arg1: memref<2x120xf32, #tpu.memory_space<vmem>>, %arg2: memref<120x128xf32, #tpu.memory_space<vmem>>, %arg3: memref<1x128xf32, #tpu.memory_space<vmem>>, %arg4: memref<128x128xf32, #tpu.memory_space<vmem>>, %arg5: memref<1x128xf32, #tpu.memory_space<vmem>>, %arg6: memref<128x12xf32, #tpu.memory_space<vmem>>, %arg7: memref<1x12xf32, #tpu.memory_space<vmem>>, %arg8: memref<2x12xf32, #tpu.memory_space<vmem>>) attributes {dimension_semantics = [#tpu.dimension_semantics<parallel>], iteration_bounds = array<i64: 1>, scalar_prefetch = 0 : i64, scratch_operands = 0 : i64, tpu.core_type = #tpu.core_type<tc>, window_params = [{transform_indices = @transform_0, window_bounds = array<i64: 2, 120>}, {pipeline_mode = #tpu.pipeline_mode<synchronous>, transform_indices = @transform_1, window_bounds = array<i64: 120, 128>}, {pipeline_mode = #tpu.pipeline_mode<synchronous>, transform_indices = @transform_2, window_bounds = array<i64: 1, 128>}, {pipeline_mode = #tpu.pipeline_mode<synchronous>, transform_indices = @transform_3, window_bounds = array<i64: 128, 128>}, {pipeline_mode = #tpu.pipeline_mode<synchronous>, transform_indices = @transform_4, window_bounds = array<i64: 1, 128>}, {pipeline_mode = #tpu.pipeline_mode<synchronous>, transform_indices = @transform_5, window_bounds = array<i64: 128, 12>}, {pipeline_mode = #tpu.pipeline_mode<synchronous>, transform_indices = @transform_6, window_bounds = array<i64: 1, 12>}, {transform_indices = @transform_7, window_bounds = array<i64: 2, 12>}]} {
    %c0 = arith.constant 0 : index
    %c0_0 = arith.constant 0 : index
    %0 = vector.load %arg1[%c0, %c0_0] : memref<2x120xf32, #tpu.memory_space<vmem>>, vector<2x120xf32>
    %c0_1 = arith.constant 0 : index
    %c0_2 = arith.constant 0 : index
    %1 = vector.load %arg2[%c0_1, %c0_2] : memref<120x128xf32, #tpu.memory_space<vmem>>, vector<120x128xf32>
    %cst = arith.constant dense<0.000000e+00> : vector<2x128xf32>
    %2 = tpu.matmul %0, %1, %cst {dimension_numbers = #tpu.dot_dimension_numbers<[1], [0], [0], [1], [0, 0, 1, 1], [], []>} : vector<2x120xf32>, vector<120x128xf32>, vector<2x128xf32> -> vector<2x128xf32>
    %c0_3 = arith.constant 0 : index
    %c0_4 = arith.constant 0 : index
    %3 = vector.load %arg3[%c0_3, %c0_4] : memref<1x128xf32, #tpu.memory_space<vmem>>, vector<1x128xf32>
    %4 = vector.broadcast %3 : vector<1x128xf32> to vector<2x128xf32>
    %5 = arith.addf %2, %4 : vector<2x128xf32>
    %cst_5 = arith.constant 0.000000e+00 : f32
    %6 = vector.broadcast %cst_5 : f32 to vector<2x128xf32>
    %7 = arith.maximumf %5, %6 : vector<2x128xf32>
    %c0_6 = arith.constant 0 : index
    %c0_7 = arith.constant 0 : index
    %8 = vector.load %arg4[%c0_6, %c0_7] : memref<128x128xf32, #tpu.memory_space<vmem>>, vector<128x128xf32>
    %cst_8 = arith.constant dense<0.000000e+00> : vector<2x128xf32>
    %9 = tpu.matmul %7, %8, %cst_8 {dimension_numbers = #tpu.dot_dimension_numbers<[1], [0], [0], [1], [0, 0, 1, 1], [], []>} : vector<2x128xf32>, vector<128x128xf32>, vector<2x128xf32> -> vector<2x128xf32>
    %c0_9 = arith.constant 0 : index
    %c0_10 = arith.constant 0 : index
    %10 = vector.load %arg5[%c0_9, %c0_10] : memref<1x128xf32, #tpu.memory_space<vmem>>, vector<1x128xf32>
    %11 = vector.broadcast %10 : vector<1x128xf32> to vector<2x128xf32>
    %12 = arith.addf %9, %11 : vector<2x128xf32>
    %cst_11 = arith.constant 0.000000e+00 : f32
    %13 = vector.broadcast %cst_11 : f32 to vector<2x128xf32>
    %14 = arith.maximumf %12, %13 : vector<2x128xf32>
    %c0_12 = arith.constant 0 : index
    %c0_13 = arith.constant 0 : index
    %15 = vector.load %arg6[%c0_12, %c0_13] : memref<128x12xf32, #tpu.memory_space<vmem>>, vector<128x12xf32>
    %cst_14 = arith.constant dense<0.000000e+00> : vector<2x12xf32>
    %16 = tpu.matmul %14, %15, %cst_14 {dimension_numbers = #tpu.dot_dimension_numbers<[1], [0], [0], [1], [0, 0, 1, 1], [], []>} : vector<2x128xf32>, vector<128x12xf32>, vector<2x12xf32> -> vector<2x12xf32>
    %c0_15 = arith.constant 0 : index
    %c0_16 = arith.constant 0 : index
    %17 = vector.load %arg7[%c0_15, %c0_16] : memref<1x12xf32, #tpu.memory_space<vmem>>, vector<1x12xf32>
    %18 = vector.broadcast %17 : vector<1x12xf32> to vector<2x12xf32>
    %19 = arith.addf %16, %18 : vector<2x12xf32>
    %c0_17 = arith.constant 0 : index
    %c0_18 = arith.constant 0 : index
    %20 = vector.load %arg8[%c0_17, %c0_18] : memref<2x12xf32, #tpu.memory_space<vmem>>, vector<2x12xf32>
    tpu.vector_store %arg8[%c0_17, %c0_18], %19 {strides = array<i32>} : memref<2x12xf32, #tpu.memory_space<vmem>>, vector<2x12xf32>,
    return
  }
  func.func @transform_0(%arg0: i32) -> (i32, i32) {
    %c0_i32 = arith.constant 0 : i32
    %c0_i32_0 = arith.constant 0 : i32
    return %arg0, %c0_i32 : i32, i32
  }
  func.func @transform_1(%arg0: i32) -> (i32, i32) {
    %c0_i32 = arith.constant 0 : i32
    %c0_i32_0 = arith.constant 0 : i32
    %c0_i32_1 = arith.constant 0 : i32
    return %c0_i32, %c0_i32_0 : i32, i32
  }
  func.func @transform_2(%arg0: i32) -> (i32, i32) {
    %c0_i32 = arith.constant 0 : i32
    %c0_i32_0 = arith.constant 0 : i32
    %c0_i32_1 = arith.constant 0 : i32
    return %c0_i32, %c0_i32_0 : i32, i32
  }
  func.func @transform_3(%arg0: i32) -> (i32, i32) {
    %c0_i32 = arith.constant 0 : i32
    %c0_i32_0 = arith.constant 0 : i32
    %c0_i32_1 = arith.constant 0 : i32
    return %c0_i32, %c0_i32_0 : i32, i32
  }
  func.func @transform_4(%arg0: i32) -> (i32, i32) {
    %c0_i32 = arith.constant 0 : i32
    %c0_i32_0 = arith.constant 0 : i32
    %c0_i32_1 = arith.constant 0 : i32
    return %c0_i32, %c0_i32_0 : i32, i32
  }
  func.func @transform_5(%arg0: i32) -> (i32, i32) {
    %c0_i32 = arith.constant 0 : i32
    %c0_i32_0 = arith.constant 0 : i32
    %c0_i32_1 = arith.constant 0 : i32
    return %c0_i32, %c0_i32_0 : i32, i32
  }
  func.func @transform_6(%arg0: i32) -> (i32, i32) {
    %c0_i32 = arith.constant 0 : i32
    %c0_i32_0 = arith.constant 0 : i32
    %c0_i32_1 = arith.constant 0 : i32
    return %c0_i32, %c0_i32_0 : i32, i32
  }
  func.func @transform_7(%arg0: i32) -> (i32, i32) {
    %c0_i32 = arith.constant 0 : i32
    %c0_i32_0 = arith.constant 0 : i32
    return %arg0, %c0_i32 : i32, i32
  }
}

</mosaic_0001>

<llo_original>
// kernel: tpu_custom_call.1
$region0: #{tpu_custom_call.1}
  #allocation0 [shape = 'u32[]', space=smem, size = 0x4, offset = 0x4, fixed_abs, tag = 'smem constant byte address 0x4 - core index']
  #allocation1 [shape = 'u32[144,128]{1,0:T(1,128)}', space=vmem, size = 0x12000, scoped, tag = 'internal scratch']
  %s0 = inlined_call_operand.vmem [shape: f32[2,120], index: 0, kind: input, shape index: {}]
  %s1 = inlined_call_operand.hbm [shape: f32[120,128], index: 1, kind: input, shape index: {}]
  %s2 = inlined_call_operand.vmem [shape: f32[1,128], index: 2, kind: input, shape index: {}]
  %s3 = inlined_call_operand.vmem [shape: f32[128,128], index: 3, kind: input, shape index: {}]
  %s4 = inlined_call_operand.vmem [shape: f32[1,128], index: 4, kind: input, shape index: {}]
  %s5 = inlined_call_operand.vmem [shape: f32[128,12], index: 5, kind: input, shape index: {}]
  %s6 = inlined_call_operand.vmem [shape: f32[1,12], index: 6, kind: input, shape index: {}]
  %s7 = inlined_call_operand.hbm [shape: f32[2,12], index: 7, kind: output, shape index: {}]
  %s8 = sld [smem:[#allocation0]]
  $region42: #{tpu_custom_call.1} parent=0
    _
  %s10 = ssub.s32 1, %s8
  %s11 = scalar_select 0, %s10, %s8
  $region1: #{tpu_custom_call.1} parent=0
    #allocation2 [shape = 'u8[61440]{0}', space=vmem, size = 0xf000, scoped, tag = 'input window, operand 1, single buffered']
    #allocation3 [shape = 's32[1]{0}', space=sflag, size = 0x4, scoped, tag = 'scoped memory for tpu_custom_call.1']
    #allocation4 [shape = 's32[1]{0}', space=sflag, size = 0x4, scoped, tag = 'scoped memory for tpu_custom_call.1']
    #allocation5 [shape = 'u8[1024]{0}', space=vmem, size = 0x400, scoped, tag = 'output window, operand 0, single buffered']
    %12 = vsyncpa [#allocation3], 0
    %13 = vsyncpa [#allocation4], 0
    // Predicated region
    $region2: #{tpu_custom_call.1} parent=1 // pred_check
      _
    $region3: #{tpu_custom_call.1} parent=1 // pred_check_branch
      %15 = sbr.rel (0) target = $region5
    $region4: #{tpu_custom_call.1} parent=1 // pred_region
      _
    $region5: #{tpu_custom_call.1} parent=1 // pred_fallthru
      _
    // Predicated region
    $region6: #{tpu_custom_call.1} parent=1 // pred_check
      _
    $region7: #{tpu_custom_call.1} parent=1 // pred_check_branch
      %17 = sbr.rel (0) target = $region9
    $region8: #{tpu_custom_call.1} parent=1 // pred_region
      %s19 = ssub.s32 1920, 1920
      %20 = vsyncadd [#allocation3], %s19
      %s21 = sshll.u32 [#allocation2], 4
      %s22 = int_to_ptr.vmem [resolvable:$true] %s21
      %27 = dma.hbm_to_vmem [thread:$0]  %s1, 1920, %s22, [#allocation3], 128, 128, 8
    $region9: #{tpu_custom_call.1} parent=1 // pred_fallthru
      _
    // Predicated region
    $region10: #{tpu_custom_call.1} parent=1 // pred_check
      _
    $region11: #{tpu_custom_call.1} parent=1 // pred_check_branch
      %29 = sbr.rel (0) target = $region13
    $region12: #{tpu_custom_call.1} parent=1 // pred_region
      _
    $region13: #{tpu_custom_call.1} parent=1 // pred_fallthru
      _
    // Predicated region
    $region14: #{tpu_custom_call.1} parent=1 // pred_check
      _
    $region15: #{tpu_custom_call.1} parent=1 // pred_check_branch
      %31 = sbr.rel (0) target = $region17
    $region16: #{tpu_custom_call.1} parent=1 // pred_region
      _
    $region17: #{tpu_custom_call.1} parent=1 // pred_fallthru
      _
    // Predicated region
    $region18: #{tpu_custom_call.1} parent=1 // pred_check
      _
    $region19: #{tpu_custom_call.1} parent=1 // pred_check_branch
      %33 = sbr.rel (0) target = $region21
    $region20: #{tpu_custom_call.1} parent=1 // pred_region
      _
    $region21: #{tpu_custom_call.1} parent=1 // pred_fallthru
      _
    // Predicated region
    $region22: #{tpu_custom_call.1} parent=1 // pred_check
      _
    $region23: #{tpu_custom_call.1} parent=1 // pred_check_branch
      %35 = sbr.rel (0) target = $region25
    $region24: #{tpu_custom_call.1} parent=1 // pred_region
      _
    $region25: #{tpu_custom_call.1} parent=1 // pred_fallthru
      _
    // Predicated region
    $region26: #{tpu_custom_call.1} parent=1 // pred_check
      _
    $region27: #{tpu_custom_call.1} parent=1 // pred_check_branch
      %37 = sbr.rel (0) target = $region29
    $region28: #{tpu_custom_call.1} parent=1 // pred_region
      _
    $region29: #{tpu_custom_call.1} parent=1 // pred_fallthru
      _
    // Predicated region
    $region30: #{tpu_custom_call.1} parent=1 // pred_check
      _
    $region31: #{tpu_custom_call.1} parent=1 // pred_check_branch
      %39 = sbr.rel (0) target = $region33
    $region32: #{tpu_custom_call.1} parent=1 // pred_region
      %40 = dma.done [#allocation3], 1920
    $region33: #{tpu_custom_call.1} parent=1 // pred_fallthru
      _
    %v41 = vld [vmem:[%s0] sm:$0x3]
    %v42 = vld [vmem:[#allocation2] sm:$0xff]
    %v43 = vld [vmem:[#allocation2 + $0x8] sm:$0xff]
    %v44 = vld [vmem:[#allocation2 + $0x10] sm:$0xff]
    %v45 = vld [vmem:[#allocation2 + $0x18] sm:$0xff]
    %v46 = vld [vmem:[#allocation2 + $0x20] sm:$0xff]
    %v47 = vld [vmem:[#allocation2 + $0x28] sm:$0xff]
    %v48 = vld [vmem:[#allocation2 + $0x30] sm:$0xff]
    %v49 = vld [vmem:[#allocation2 + $0x38] sm:$0xff]
    %v50 = vld [vmem:[#allocation2 + $0x40] sm:$0xff]
    %v51 = vld [vmem:[#allocation2 + $0x48] sm:$0xff]
    %v52 = vld [vmem:[#allocation2 + $0x50] sm:$0xff]
    %v53 = vld [vmem:[#allocation2 + $0x58] sm:$0xff]
    %v54 = vld [vmem:[#allocation2 + $0x60] sm:$0xff]
    %v55 = vld [vmem:[#allocation2 + $0x68] sm:$0xff]
    %v56 = vld [vmem:[#allocation2 + $0x70] sm:$0xff]
    %v57 = vld [vmem:[%s2] sm:$0x1]
    %v59 = vlaneseq
    %v60 = vshrl.u32 %v59, 7
    %v61 = vsub.s32 0, %v60
    %v62 = vrot.slane %v57, %v61
    %vm64 = vcmask 982016
    %v66 = vsel %vm64, %v41, 0
    %68 = vmatprep.subr.mxu0 0.0
    %69 = vmatpush1.msra.mxu0 %v42
    %70 = vmatprep.subr.mxu0 0.0
    %71 = vmatpush1.msra.mxu0 %v43
    %72 = vmatprep.subr.mxu0 0.0
    %73 = vmatpush1.msra.mxu0 %v44
    %74 = vmatprep.subr.mxu0 0.0
    %75 = vmatpush1.msra.mxu0 %v45
    %76 = vmatprep.subr.mxu0 0.0
    %77 = vmatpush1.msra.mxu0 %v46
    %78 = vmatprep.subr.mxu0 0.0
    %79 = vmatpush1.msra.mxu0 %v47
    %80 = vmatprep.subr.mxu0 0.0
    %81 = vmatpush1.msra.mxu0 %v48
    %82 = vmatprep.subr.mxu0 0.0
    %83 = vmatpush1.msra.mxu0 %v49
    %84 = vmatprep.subr.mxu0 0.0
    %85 = vmatpush1.msra.mxu0 %v50
    %86 = vmatprep.subr.mxu0 0.0
    %87 = vmatpush1.msra.mxu0 %v51
    %88 = vmatprep.subr.mxu0 0.0
    %89 = vmatpush1.msra.mxu0 %v52
    %90 = vmatprep.subr.mxu0 0.0
    %91 = vmatpush1.msra.mxu0 %v53
    %92 = vmatprep.subr.mxu0 0.0
    %93 = vmatpush1.msra.mxu0 %v54
    %94 = vmatprep.subr.mxu0 0.0
    %95 = vmatpush1.msra.mxu0 %v55
    %96 = vmatprep.subr.mxu0 0.0
    %97 = vmatpush1.msra.mxu0 %v56
    %98 = vmatprep.subr.mxu0 0.0
    %99 = vmatpush1.msra.mxu0 0.0
    %100 = vmatprep.subr.mxu0 0.0
    %101 = vmatpush1.msra.mxu0 0.0
    %102 = vmatprep.subr.mxu0 0.0
    %103 = vmatpush1.msra.mxu0 0.0
    %104 = vmatprep.subr.mxu0 0.0
    %105 = vmatpush1.msra.mxu0 0.0
    %106 = vmatprep.subr.mxu0 0.0
    %107 = vmatpush1.msra.mxu0 0.0
    %108 = vmatprep.subr.mxu0 0.0
    %109 = vmatpush1.msra.mxu0 0.0
    %110 = vmatprep.subr.mxu0 0.0
    %111 = vmatpush1.msra.mxu0 0.0
    %112 = vmatprep.subr.mxu0 0.0
    %113 = vmatpush1.msra.mxu0 0.0
    %114 = vmatprep.subr.mxu0 0.0
    %115 = vmatpush1.msra.mxu0 0.0
    %116 = vmatprep.subr.mxu0 0.0
    %117 = vmatpush1.msra.mxu0 0.0
    %118 = vmatprep.subr.mxu0 0.0
    %119 = vmatpush1.msra.mxu0 0.0
    %120 = vmatprep.subr.mxu0 0.0
    %121 = vmatpush1.msra.mxu0 0.0
    %122 = vmatprep.subr.mxu0 0.0
    %123 = vmatpush1.msra.mxu0 0.0
    %124 = vmatprep.subr.mxu0 0.0
    %125 = vmatpush1.msra.mxu0 0.0
    %126 = vmatprep.subr.mxu0 0.0
    %127 = vmatpush1.msra.mxu0 0.0
    %128 = vmatprep.subr.mxu0 0.0
    %129 = vmatpush1.msra.mxu0 0.0
    %130 = vmatprep.subr.mxu0 0.0
    %131 = vmatpush1.msra.mxu0 0.0
    %132 = vmatprep.mubr.f32.mxu0 0.0
    %133 = vmatmul.mubr.f32.gmra.mrb[0].mxu0 %v66
    %v134 = vpop.f32.mrb[0].mxu0
    %v135 = vadd.f32 %v62, %v134
    %v136 = vpop.f32.mrb[0].mxu0
    %137 = vdwg.mxu0
    %v138 = vmax.f32 %v135, 0.0
    %v139 = vld [vmem:[%s3] sm:$0xff]
    %v140 = vld [vmem:[%s3 + $0x8] sm:$0xff]
    %v141 = vld [vmem:[%s3 + $0x10] sm:$0xff]
    %v142 = vld [vmem:[%s3 + $0x18] sm:$0xff]
    %v143 = vld [vmem:[%s3 + $0x20] sm:$0xff]
    %v144 = vld [vmem:[%s3 + $0x28] sm:$0xff]
    %v145 = vld [vmem:[%s3 + $0x30] sm:$0xff]
    %v146 = vld [vmem:[%s3 + $0x38] sm:$0xff]
    %v147 = vld [vmem:[%s3 + $0x40] sm:$0xff]
    %v148 = vld [vmem:[%s3 + $0x48] sm:$0xff]
    %v149 = vld [vmem:[%s3 + $0x50] sm:$0xff]
    %v150 = vld [vmem:[%s3 + $0x58] sm:$0xff]
    %v151 = vld [vmem:[%s3 + $0x60] sm:$0xff]
    %v152 = vld [vmem:[%s3 + $0x68] sm:$0xff]
    %v153 = vld [vmem:[%s3 + $0x70] sm:$0xff]
    %v154 = vld [vmem:[%s3 + $0x78] sm:$0xff]
    %v155 = vld [vmem:[%s4] sm:$0x1]
    %v157 = vlaneseq
    %v158 = vshrl.u32 %v157, 7
    %v159 = vsub.s32 0, %v158
    %v160 = vrot.slane %v155, %v159
    %162 = vmatprep.subr.mxu0 0.0
    %163 = vmatpush1.msra.mxu0 %v139
    %164 = vmatprep.subr.mxu0 0.0
    %165 = vmatpush1.msra.mxu0 %v140
    %166 = vmatprep.subr.mxu0 0.0
    %167 = vmatpush1.msra.mxu0 %v141
    %168 = vmatprep.subr.mxu0 0.0
    %169 = vmatpush1.msra.mxu0 %v142
    %170 = vmatprep.subr.mxu0 0.0
    %171 = vmatpush1.msra.mxu0 %v143
    %172 = vmatprep.subr.mxu0 0.0
    %173 = vmatpush1.msra.mxu0 %v144
    %174 = vmatprep.subr.mxu0 0.0
    %175 = vmatpush1.msra.mxu0 %v145
    %176 = vmatprep.subr.mxu0 0.0
    %177 = vmatpush1.msra.mxu0 %v146
    %178 = vmatprep.subr.mxu0 0.0
    %179 = vmatpush1.msra.mxu0 %v147
    %180 = vmatprep.subr.mxu0 0.0
    %181 = vmatpush1.msra.mxu0 %v148
    %182 = vmatprep.subr.mxu0 0.0
    %183 = vmatpush1.msra.mxu0 %v149
    %184 = vmatprep.subr.mxu0 0.0
    %185 = vmatpush1.msra.mxu0 %v150
    %186 = vmatprep.subr.mxu0 0.0
    %187 = vmatpush1.msra.mxu0 %v151
    %188 = vmatprep.subr.mxu0 0.0
    %189 = vmatpush1.msra.mxu0 %v152
    %190 = vmatprep.subr.mxu0 0.0
    %191 = vmatpush1.msra.mxu0 %v153
    %192 = vmatprep.subr.mxu0 0.0
    %193 = vmatpush1.msra.mxu0 %v154
    %194 = vmatprep.subr.mxu0 0.0
    %195 = vmatpush1.msra.mxu0 0.0
    %196 = vmatprep.subr.mxu0 0.0
    %197 = vmatpush1.msra.mxu0 0.0
    %198 = vmatprep.subr.mxu0 0.0
    %199 = vmatpush1.msra.mxu0 0.0
    %200 = vmatprep.subr.mxu0 0.0
    %201 = vmatpush1.msra.mxu0 0.0
    %202 = vmatprep.subr.mxu0 0.0
    %203 = vmatpush1.msra.mxu0 0.0
    %204 = vmatprep.subr.mxu0 0.0
    %205 = vmatpush1.msra.mxu0 0.0
    %206 = vmatprep.subr.mxu0 0.0
    %207 = vmatpush1.msra.mxu0 0.0
    %208 = vmatprep.subr.mxu0 0.0
    %209 = vmatpush1.msra.mxu0 0.0
    %210 = vmatprep.subr.mxu0 0.0
    %211 = vmatpush1.msra.mxu0 0.0
    %212 = vmatprep.subr.mxu0 0.0
    %213 = vmatpush1.msra.mxu0 0.0
    %214 = vmatprep.subr.mxu0 0.0
    %215 = vmatpush1.msra.mxu0 0.0
    %216 = vmatprep.subr.mxu0 0.0
    %217 = vmatpush1.msra.mxu0 0.0
    %218 = vmatprep.subr.mxu0 0.0
    %219 = vmatpush1.msra.mxu0 0.0
    %220 = vmatprep.subr.mxu0 0.0
    %221 = vmatpush1.msra.mxu0 0.0
    %222 = vmatprep.subr.mxu0 0.0
    %223 = vmatpush1.msra.mxu0 0.0
    %224 = vmatprep.subr.mxu0 0.0
    %225 = vmatpush1.msra.mxu0 0.0
    %226 = vmatprep.mubr.f32.mxu0 0.0
    %227 = vmatmul.mubr.f32.gmra.mrb[0].mxu0 %v138
    %v228 = vpop.f32.mrb[0].mxu0
    %v229 = vadd.f32 %v160, %v228
    %v230 = vpop.f32.mrb[0].mxu0
    %231 = vdwg.mxu0
    %v232 = vmax.f32 %v229, 0.0
    %v233 = vld [vmem:[%s5] sm:$0xff]
    %v234 = vld [vmem:[%s5 + $0x8] sm:$0xff]
    %v235 = vld [vmem:[%s5 + $0x10] sm:$0xff]
    %v236 = vld [vmem:[%s5 + $0x18] sm:$0xff]
    %v237 = vld [vmem:[%s5 + $0x20] sm:$0xff]
    %v238 = vld [vmem:[%s5 + $0x28] sm:$0xff]
    %v239 = vld [vmem:[%s5 + $0x30] sm:$0xff]
    %v240 = vld [vmem:[%s5 + $0x38] sm:$0xff]
    %v241 = vld [vmem:[%s5 + $0x40] sm:$0xff]
    %v242 = vld [vmem:[%s5 + $0x48] sm:$0xff]
    %v243 = vld [vmem:[%s5 + $0x50] sm:$0xff]
    %v244 = vld [vmem:[%s5 + $0x58] sm:$0xff]
    %v245 = vld [vmem:[%s5 + $0x60] sm:$0xff]
    %v246 = vld [vmem:[%s5 + $0x68] sm:$0xff]
    %v247 = vld [vmem:[%s5 + $0x70] sm:$0xff]
    %v248 = vld [vmem:[%s5 + $0x78] sm:$0xff]
    %v249 = vld [vmem:[%s6] sm:$0x1]
    %v251 = vlaneseq
    %v252 = vshrl.u32 %v251, 7
    %v253 = vsub.s32 0, %v252
    %v254 = vrot.slane %v249, %v253
    %256 = vmatprep.subr.mxu0 0.0
    %257 = vmatpush1.msra.mxu0 %v233
    %258 = vmatprep.subr.mxu0 0.0
    %259 = vmatpush1.msra.mxu0 %v234
    %260 = vmatprep.subr.mxu0 0.0
    %261 = vmatpush1.msra.mxu0 %v235
    %262 = vmatprep.subr.mxu0 0.0
    %263 = vmatpush1.msra.mxu0 %v236
    %264 = vmatprep.subr.mxu0 0.0
    %265 = vmatpush1.msra.mxu0 %v237
    %266 = vmatprep.subr.mxu0 0.0
    %267 = vmatpush1.msra.mxu0 %v238
    %268 = vmatprep.subr.mxu0 0.0
    %269 = vmatpush1.msra.mxu0 %v239
    %270 = vmatprep.subr.mxu0 0.0
    %271 = vmatpush1.msra.mxu0 %v240
    %272 = vmatprep.subr.mxu0 0.0
    %273 = vmatpush1.msra.mxu0 %v241
    %274 = vmatprep.subr.mxu0 0.0
    %275 = vmatpush1.msra.mxu0 %v242
    %276 = vmatprep.subr.mxu0 0.0
    %277 = vmatpush1.msra.mxu0 %v243
    %278 = vmatprep.subr.mxu0 0.0
    %279 = vmatpush1.msra.mxu0 %v244
    %280 = vmatprep.subr.mxu0 0.0
    %281 = vmatpush1.msra.mxu0 %v245
    %282 = vmatprep.subr.mxu0 0.0
    %283 = vmatpush1.msra.mxu0 %v246
    %284 = vmatprep.subr.mxu0 0.0
    %285 = vmatpush1.msra.mxu0 %v247
    %286 = vmatprep.subr.mxu0 0.0
    %287 = vmatpush1.msra.mxu0 %v248
    %288 = vmatprep.subr.mxu0 0.0
    %289 = vmatpush1.msra.mxu0 0.0
    %290 = vmatprep.subr.mxu0 0.0
    %291 = vmatpush1.msra.mxu0 0.0
    %292 = vmatprep.subr.mxu0 0.0
    %293 = vmatpush1.msra.mxu0 0.0
    %294 = vmatprep.subr.mxu0 0.0
    %295 = vmatpush1.msra.mxu0 0.0
    %296 = vmatprep.subr.mxu0 0.0
    %297 = vmatpush1.msra.mxu0 0.0
    %298 = vmatprep.subr.mxu0 0.0
    %299 = vmatpush1.msra.mxu0 0.0
    %300 = vmatprep.subr.mxu0 0.0
    %301 = vmatpush1.msra.mxu0 0.0
    %302 = vmatprep.subr.mxu0 0.0
    %303 = vmatpush1.msra.mxu0 0.0
    %304 = vmatprep.subr.mxu0 0.0
    %305 = vmatpush1.msra.mxu0 0.0
    %306 = vmatprep.subr.mxu0 0.0
    %307 = vmatpush1.msra.mxu0 0.0
    %308 = vmatprep.subr.mxu0 0.0
    %309 = vmatpush1.msra.mxu0 0.0
    %310 = vmatprep.subr.mxu0 0.0
    %311 = vmatpush1.msra.mxu0 0.0
    %312 = vmatprep.subr.mxu0 0.0
    %313 = vmatpush1.msra.mxu0 0.0
    %314 = vmatprep.subr.mxu0 0.0
    %315 = vmatpush1.msra.mxu0 0.0
    %316 = vmatprep.subr.mxu0 0.0
    %317 = vmatpush1.msra.mxu0 0.0
    %318 = vmatprep.subr.mxu0 0.0
    %319 = vmatpush1.msra.mxu0 0.0
    %320 = vmatprep.mubr.f32.mxu0 0.0
    %321 = vmatmul.mubr.f32.gmra.mrb[0].mxu0 %v232
    %v322 = vpop.f32.mrb[0].mxu0
    %v323 = vadd.f32 %v254, %v322
    %v324 = vpop.f32.mrb[0].mxu0
    %325 = vdwg.mxu0
    %vm326 = vcmask 91136
    %327 = vst.msk [vmem:[#allocation5] sm:$0x3] %vm326, %v323
    // Predicated region
    $region34: #{tpu_custom_call.1} parent=1 // pred_check
      _
    $region35: #{tpu_custom_call.1} parent=1 // pred_check_branch
      %329 = sbr.rel (0) target = $region37
    $region36: #{tpu_custom_call.1} parent=1 // pred_region
      %s331 = ssub.s32 32, 32
      %332 = vsyncadd [#allocation4], %s331
      %s334 = sshll.u32 [#allocation5], 4
      %s335 = int_to_ptr.vmem [resolvable:$true] %s334
      %337 = dma.vmem_to_hbm [thread:$0]  %s335, 32, %s7, [#allocation4]
    $region37: #{tpu_custom_call.1} parent=1 // pred_fallthru
      _
    // Predicated region
    $region38: #{tpu_custom_call.1} parent=1 // pred_check
      _
    $region39: #{tpu_custom_call.1} parent=1 // pred_check_branch
      %339 = sbr.rel (0) target = $region41
    $region40: #{tpu_custom_call.1} parent=1 // pred_region
      %340 = dma.done [#allocation4], 32
    $region41: #{tpu_custom_call.1} parent=1 // pred_fallthru
      _
    %341 = vsyncpa [#allocation3], 1
    %342 = vsyncpa [#allocation4], 1

</llo_original>
